<compile_context>
chip_gen: v6e
topology: v6e:2x2x1
jax: 0.10.0
libtpu: 0.0.40
codegen_flags: <defaults>
</compile_context>

<pallas_src>
import jax
import jax.numpy as jnp
from jax import lax
from jax.experimental import pallas as pl
from jax.experimental.pallas import tpu as pltpu

KSIZE = 3  # kernel_size from the module default (padding = 1 -> "same")


def _div_mod(idx, d):
    """Vector div/mod that strength-reduces to shift/and for power-of-two d."""
    if d & (d - 1) == 0:
        sh = d.bit_length() - 1
        return idx >> sh, idx & (d - 1)
    return idx // d, idx % d


def _make_dense_kernel(H, W, C, G, N):
    """Kernel body for fixed spatial/channel/batch sizes."""
    S = H * W          # per-image flattened spatial size
    L = N * S          # total lane width (batch folded into lanes)

    def kernel(x_ref, w_ref, out_ref):
        # x_ref  : (C, L)      channels on sublanes, N*H*W on lanes
        # w_ref  : (G, 9*C)    conv weight, contraction index = k*C + c
        # out_ref: (C+G, L)    [x ; relu(conv)] output slab
        x = x_ref[...]
        w = w_ref[...]

        # Per-image lane bookkeeping for the "same" zero-pad boundary masks.
        li = lax.broadcasted_iota(jnp.int32, (1, L), 1)
        _, lj = _div_mod(li, S)            # index within the image
        h_idx, w_idx = _div_mod(lj, W)
        h_ge1 = h_idx >= 1
        h_ltm = h_idx < (H - 1)
        w_ge1 = w_idx >= 1
        w_ltm = w_idx < (W - 1)

        # Build the 9 shifted+masked taps and stack them on the contraction
        # (sublane) axis: taps[k*C + c, i] = zero_padded_x[c, i + shift_k].
        taps = []
        for dh in range(KSIZE):
            for dw in range(KSIZE):
                s = (dh - 1) * W + (dw - 1)        # flattened tap shift
                # tap[c, i] = x[c, (i + s) mod L]; wrapped lanes are masked.
                tap = x if s == 0 else pltpu.roll(x, shift=(-s) % L, axis=1)

                mask = None
                if dh == 0:
                    mask = h_ge1
                elif dh == 2:
                    mask = h_ltm
                if dw == 0:
                    mask = w_ge1 if mask is None else (mask & w_ge1)
                elif dw == 2:
                    mask = w_ltm if mask is None else (mask & w_ltm)
                if mask is not None:
                    tap = jnp.where(mask, tap, 0.0)
                taps.append(tap)
        taps_kc = jnp.concatenate(taps, axis=0)    # (9*C, L)

        # Single fused MXU matmul over the 9*C-deep contraction.
        acc = jnp.dot(w, taps_kc, preferred_element_type=jnp.float32)  # (G, L)

        # One unmasked, lane-dense full-tile store of the whole output slab.
        out_ref[...] = jnp.concatenate(
            [x.astype(out_ref.dtype),
             jnp.maximum(acc, 0.0).astype(out_ref.dtype)], axis=0)

    return kernel


def make_dense_forward(x_nchw, weight_gckk):
    """x_nchw: (N, C, H, W) f32.  weight_gckk: (G, C, 3, 3) f32 (PyTorch OIHW).
    Returns (N, C+G, H, W) f32, matching torch.cat((x, relu(conv(x))), 1)."""
    N, C, H, W = x_nchw.shape
    G = weight_gckk.shape[0]
    L = N * H * W

    # Fold batch into the lane axis: (N,C,H,W) -> (C, N*H*W).  Tiny transpose.
    x_flat = jnp.transpose(x_nchw, (1, 0, 2, 3)).reshape(C, L)
    # Weight (G,C,3,3) -> (G, 9*C) with contraction index k*C + c, k = dh*3+dw,
    # matching the tap stacking order inside the kernel.
    w_flat = jnp.transpose(weight_gckk, (0, 2, 3, 1)).reshape(G, KSIZE * KSIZE * C)

    out_flat = pl.pallas_call(
        _make_dense_kernel(H, W, C, G, N),
        out_shape=jax.ShapeDtypeStruct((C + G, L), x_nchw.dtype),
        grid_spec=pltpu.PrefetchScalarGridSpec(
            num_scalar_prefetch=0,
            grid=(1,),
            in_specs=[
                pl.BlockSpec((C, L), lambda i: (0, 0)),
                pl.BlockSpec((G, KSIZE * KSIZE * C), lambda i: (0, 0)),
            ],
            out_specs=pl.BlockSpec((C + G, L), lambda i: (0, 0)),
        ),
        compiler_params=pltpu.CompilerParams(
            dimension_semantics=("arbitrary",)),
    )(x_flat, w_flat)

    # (C+G, N*H*W) -> (N, C+G, H, W); tiny wrapper-side transpose.
    return out_flat.reshape(C + G, N, H, W).transpose(1, 0, 2, 3)


if __name__ == "__main__":
    # Small shapes consistent with the module: nChannels=4, growthRate=8.
    N, C, H, W = 2, 4, 16, 16
    G = 8

    key = jax.random.PRNGKey(0)
    kx, kw = jax.random.split(key)
    x = jax.random.normal(kx, (N, C, H, W), dtype=jnp.float32)
    fan_in = C * KSIZE * KSIZE
    weight = jax.random.normal(kw, (G, C, KSIZE, KSIZE), dtype=jnp.float32) / jnp.sqrt(fan_in)

    out = make_dense_forward(x, weight)
    out = jax.block_until_ready(out)
    assert out.shape == (N, C + G, H, W), out.shape

    # Reference check (pure JAX conv) to validate the kernel's semantics.
    ref_conv = jax.lax.conv_general_dilated(
        x, weight, window_strides=(1, 1), padding="SAME",
        dimension_numbers=("NCHW", "OIHW", "NCHW"))
    ref = jnp.concatenate([x, jnp.maximum(ref_conv, 0.0)], axis=1)
    # Tolerance allows for MXU-vs-XLA-conv default f32 precision differences.
    err = float(jnp.max(jnp.abs(out - ref)))
    assert err < 2e-2, err

    print("KERNEL_OK")
</pallas_src>

<mosaic_0001>
module attributes {stable_mosaic.version = 11 : i64} {
  func.func @kernel(%arg0: i32, %arg1: memref<4x512xf32, #tpu.memory_space<vmem>>, %arg2: memref<8x36xf32, #tpu.memory_space<vmem>>, %arg3: memref<12x512xf32, #tpu.memory_space<vmem>>) attributes {dimension_semantics = [#tpu.dimension_semantics<arbitrary>], iteration_bounds = array<i64: 1>, scalar_prefetch = 0 : i64, scratch_operands = 0 : i64, tpu.core_type = #tpu.core_type<tc>, window_params = [{pipeline_mode = #tpu.pipeline_mode<synchronous>, transform_indices = @transform_0, window_bounds = array<i64: 4, 512>}, {pipeline_mode = #tpu.pipeline_mode<synchronous>, transform_indices = @transform_1, window_bounds = array<i64: 8, 36>}, {pipeline_mode = #tpu.pipeline_mode<synchronous>, transform_indices = @transform_2, window_bounds = array<i64: 12, 512>}]} {
    %c0 = arith.constant 0 : index
    %c0_0 = arith.constant 0 : index
    %0 = vector.load %arg1[%c0, %c0_0] : memref<4x512xf32, #tpu.memory_space<vmem>>, vector<4x512xf32>
    %c0_1 = arith.constant 0 : index
    %c0_2 = arith.constant 0 : index
    %1 = vector.load %arg2[%c0_1, %c0_2] : memref<8x36xf32, #tpu.memory_space<vmem>>, vector<8x36xf32>
    %2 = tpu.iota {dimensions = array<i32: 1>} : vector<1x512xi32>
    %c255_i32 = arith.constant 255 : i32
    %3 = vector.broadcast %c255_i32 : i32 to vector<1x512xi32>
    %4 = arith.andi %2, %3 : vector<1x512xi32>
    %c4_i32 = arith.constant 4 : i32
    %5 = vector.broadcast %c4_i32 : i32 to vector<1x512xi32>
    %6 = arith.shrsi %4, %5 : vector<1x512xi32>
    %c15_i32 = arith.constant 15 : i32
    %7 = vector.broadcast %c15_i32 : i32 to vector<1x512xi32>
    %8 = arith.andi %4, %7 : vector<1x512xi32>
    %c1_i32 = arith.constant 1 : i32
    %9 = vector.broadcast %c1_i32 : i32 to vector<1x512xi32>
    %10 = arith.cmpi sge, %6, %9 : vector<1x512xi32>
    %c15_i32_3 = arith.constant 15 : i32
    %11 = vector.broadcast %c15_i32_3 : i32 to vector<1x512xi32>
    %12 = arith.cmpi slt, %6, %11 : vector<1x512xi32>
    %c1_i32_4 = arith.constant 1 : i32
    %13 = vector.broadcast %c1_i32_4 : i32 to vector<1x512xi32>
    %14 = arith.cmpi sge, %8, %13 : vector<1x512xi32>
    %c15_i32_5 = arith.constant 15 : i32
    %15 = vector.broadcast %c15_i32_5 : i32 to vector<1x512xi32>
    %16 = arith.cmpi slt, %8, %15 : vector<1x512xi32>
    %c17_i32 = arith.constant 17 : i32
    %17 = tpu.dynamic_rotate %0 by %c17_i32 dim 1 : vector<4x512xf32>, i32 -> vector<4x512xf32>
    %18 = arith.andi %10, %14 : vector<1x512xi1>
    %cst = arith.constant 0.000000e+00 : f32
    %19 = vector.shape_cast %18 : vector<1x512xi1> to vector<1x512xi1>
    %20 = vector.broadcast %19 : vector<1x512xi1> to vector<4x512xi1>
    %21 = vector.broadcast %cst : f32 to vector<4x512xf32>
    %22 = arith.select %20, %17, %21 : vector<4x512xi1>, vector<4x512xf32>
    %c16_i32 = arith.constant 16 : i32
    %23 = tpu.dynamic_rotate %0 by %c16_i32 dim 1 : vector<4x512xf32>, i32 -> vector<4x512xf32>
    %cst_6 = arith.constant 0.000000e+00 : f32
    %24 = vector.shape_cast %10 : vector<1x512xi1> to vector<1x512xi1>
    %25 = vector.broadcast %24 : vector<1x512xi1> to vector<4x512xi1>
    %26 = vector.broadcast %cst_6 : f32 to vector<4x512xf32>
    %27 = arith.select %25, %23, %26 : vector<4x512xi1>, vector<4x512xf32>
    %c15_i32_7 = arith.constant 15 : i32
    %28 = tpu.dynamic_rotate %0 by %c15_i32_7 dim 1 : vector<4x512xf32>, i32 -> vector<4x512xf32>
    %29 = arith.andi %10, %16 : vector<1x512xi1>
    %cst_8 = arith.constant 0.000000e+00 : f32
    %30 = vector.shape_cast %29 : vector<1x512xi1> to vector<1x512xi1>
    %31 = vector.broadcast %30 : vector<1x512xi1> to vector<4x512xi1>
    %32 = vector.broadcast %cst_8 : f32 to vector<4x512xf32>
    %33 = arith.select %31, %28, %32 : vector<4x512xi1>, vector<4x512xf32>
    %c1_i32_9 = arith.constant 1 : i32
    %34 = tpu.dynamic_rotate %0 by %c1_i32_9 dim 1 : vector<4x512xf32>, i32 -> vector<4x512xf32>
    %cst_10 = arith.constant 0.000000e+00 : f32
    %35 = vector.shape_cast %14 : vector<1x512xi1> to vector<1x512xi1>
    %36 = vector.broadcast %35 : vector<1x512xi1> to vector<4x512xi1>
    %37 = vector.broadcast %cst_10 : f32 to vector<4x512xf32>
    %38 = arith.select %36, %34, %37 : vector<4x512xi1>, vector<4x512xf32>
    %c511_i32 = arith.constant 511 : i32
    %39 = tpu.dynamic_rotate %0 by %c511_i32 dim 1 : vector<4x512xf32>, i32 -> vector<4x512xf32>
    %cst_11 = arith.constant 0.000000e+00 : f32
    %40 = vector.shape_cast %16 : vector<1x512xi1> to vector<1x512xi1>
    %41 = vector.broadcast %40 : vector<1x512xi1> to vector<4x512xi1>
    %42 = vector.broadcast %cst_11 : f32 to vector<4x512xf32>
    %43 = arith.select %41, %39, %42 : vector<4x512xi1>, vector<4x512xf32>
    %c497_i32 = arith.constant 497 : i32
    %44 = tpu.dynamic_rotate %0 by %c497_i32 dim 1 : vector<4x512xf32>, i32 -> vector<4x512xf32>
    %45 = arith.andi %12, %14 : vector<1x512xi1>
    %cst_12 = arith.constant 0.000000e+00 : f32
    %46 = vector.shape_cast %45 : vector<1x512xi1> to vector<1x512xi1>
    %47 = vector.broadcast %46 : vector<1x512xi1> to vector<4x512xi1>
    %48 = vector.broadcast %cst_12 : f32 to vector<4x512xf32>
    %49 = arith.select %47, %44, %48 : vector<4x512xi1>, vector<4x512xf32>
    %c496_i32 = arith.constant 496 : i32
    %50 = tpu.dynamic_rotate %0 by %c496_i32 dim 1 : vector<4x512xf32>, i32 -> vector<4x512xf32>
    %cst_13 = arith.constant 0.000000e+00 : f32
    %51 = vector.shape_cast %12 : vector<1x512xi1> to vector<1x512xi1>
    %52 = vector.broadcast %51 : vector<1x512xi1> to vector<4x512xi1>
    %53 = vector.broadcast %cst_13 : f32 to vector<4x512xf32>
    %54 = arith.select %52, %50, %53 : vector<4x512xi1>, vector<4x512xf32>
    %c495_i32 = arith.constant 495 : i32
    %55 = tpu.dynamic_rotate %0 by %c495_i32 dim 1 : vector<4x512xf32>, i32 -> vector<4x512xf32>
    %56 = arith.andi %12, %16 : vector<1x512xi1>
    %cst_14 = arith.constant 0.000000e+00 : f32
    %57 = vector.shape_cast %56 : vector<1x512xi1> to vector<1x512xi1>
    %58 = vector.broadcast %57 : vector<1x512xi1> to vector<4x512xi1>
    %59 = vector.broadcast %cst_14 : f32 to vector<4x512xf32>
    %60 = arith.select %58, %55, %59 : vector<4x512xi1>, vector<4x512xf32>
    %61 = tpu.concatenate %22, %27, %33, %38, %0, %43, %49, %54, %60 in 0 : vector<4x512xf32>, vector<4x512xf32>, vector<4x512xf32>, vector<4x512xf32>, vector<4x512xf32>, vector<4x512xf32>, vector<4x512xf32>, vector<4x512xf32>, vector<4x512xf32> -> vector<36x512xf32>
    %cst_15 = arith.constant dense<0.000000e+00> : vector<8x512xf32>
    %62 = tpu.matmul %1, %61, %cst_15 {dimension_numbers = #tpu.dot_dimension_numbers<[1], [0], [0], [1], [0, 0, 1, 1], [], []>} : vector<8x36xf32>, vector<36x512xf32>, vector<8x512xf32> -> vector<8x512xf32>
    %cst_16 = arith.constant 0.000000e+00 : f32
    %63 = vector.broadcast %cst_16 : f32 to vector<8x512xf32>
    %64 = arith.maximumf %62, %63 : vector<8x512xf32>
    %65 = tpu.concatenate %0, %64 in 0 : vector<4x512xf32>, vector<8x512xf32> -> vector<12x512xf32>
    %c0_17 = arith.constant 0 : index
    %c0_18 = arith.constant 0 : index
    %66 = vector.load %arg3[%c0_17, %c0_18] : memref<12x512xf32, #tpu.memory_space<vmem>>, vector<12x512xf32>
    tpu.vector_store %arg3[%c0_17, %c0_18], %65 {strides = array<i32>} : memref<12x512xf32, #tpu.memory_space<vmem>>, vector<12x512xf32>,
    return
  }
  func.func @transform_0(%arg0: i32) -> (i32, i32) {
    %c0_i32 = arith.constant 0 : i32
    %c0_i32_0 = arith.constant 0 : i32
    %c0_i32_1 = arith.constant 0 : i32
    return %c0_i32, %c0_i32_0 : i32, i32
  }
  func.func @transform_1(%arg0: i32) -> (i32, i32) {
    %c0_i32 = arith.constant 0 : i32
    %c0_i32_0 = arith.constant 0 : i32
    %c0_i32_1 = arith.constant 0 : i32
    return %c0_i32, %c0_i32_0 : i32, i32
  }
  func.func @transform_2(%arg0: i32) -> (i32, i32) {
    %c0_i32 = arith.constant 0 : i32
    %c0_i32_0 = arith.constant 0 : i32
    %c0_i32_1 = arith.constant 0 : i32
    return %c0_i32, %c0_i32_0 : i32, i32
  }
}

</mosaic_0001>

<llo_original>
// kernel: tpu_custom_call.1
$region0: #{tpu_custom_call.1}
  #allocation0 [shape = 'u32[]', space=smem, size = 0x4, offset = 0x4, fixed_abs, tag = 'smem constant byte address 0x4 - core index']
  #allocation1 [shape = 'u32[144,128]{1,0:T(1,128)}', space=vmem, size = 0x12000, scoped, tag = 'internal scratch']
  %s0 = inlined_call_operand.hbm [shape: f32[4,512], index: 0, kind: input, shape index: {}]
  %s1 = inlined_call_operand.hbm [shape: f32[8,36], index: 1, kind: input, shape index: {}]
  %s2 = inlined_call_operand.hbm [shape: f32[12,512], index: 2, kind: output, shape index: {}]
  %s3 = sld [smem:[#allocation0]]
  $region26: #{tpu_custom_call.1} parent=0
    _
  %s5 = ssub.s32 1, %s3
  %s6 = scalar_select 0, %s5, %s3
  $region1: #{tpu_custom_call.1} parent=0
    #allocation2 [shape = 'u8[8192]{0}', space=vmem, size = 0x2000, scoped, tag = 'input window, operand 0, single buffered']
    #allocation3 [shape = 's32[1]{0}', space=sflag, size = 0x4, scoped, tag = 'scoped memory for tpu_custom_call.1']
    #allocation4 [shape = 's32[1]{0}', space=sflag, size = 0x4, scoped, tag = 'scoped memory for tpu_custom_call.1']
    #allocation5 [shape = 'u8[4096]{0}', space=vmem, size = 0x1000, scoped, tag = 'input window, operand 1, single buffered']
    #allocation6 [shape = 's32[1]{0}', space=sflag, size = 0x4, scoped, tag = 'scoped memory for tpu_custom_call.1']
    #allocation7 [shape = 'u8[32768]{0}', space=vmem, size = 0x8000, scoped, tag = 'output window, operand 0, single buffered']
    %7 = vsyncpa [#allocation3], 0
    %8 = vsyncpa [#allocation6], 0
    %9 = vsyncpa [#allocation4], 0
    // Predicated region
    $region2: #{tpu_custom_call.1} parent=1 // pred_check
      _
    $region3: #{tpu_custom_call.1} parent=1 // pred_check_branch
      %11 = sbr.rel (0) target = $region5
    $region4: #{tpu_custom_call.1} parent=1 // pred_region
      %s13 = ssub.s32 256, 256
      %14 = vsyncadd [#allocation3], %s13
      %s16 = sshll.u32 [#allocation2], 4
      %s17 = int_to_ptr.vmem [resolvable:$true] %s16
      %19 = dma.hbm_to_vmem [thread:$0]  %s0, 256, %s17, [#allocation3]
    $region5: #{tpu_custom_call.1} parent=1 // pred_fallthru
      _
    // Predicated region
    $region6: #{tpu_custom_call.1} parent=1 // pred_check
      _
    $region7: #{tpu_custom_call.1} parent=1 // pred_check_branch
      %21 = sbr.rel (0) target = $region9
    $region8: #{tpu_custom_call.1} parent=1 // pred_region
      %s23 = ssub.s32 128, 128
      %24 = vsyncadd [#allocation6], %s23
      %s26 = sshll.u32 [#allocation5], 4
      %s27 = int_to_ptr.vmem [resolvable:$true] %s26
      %29 = dma.hbm_to_vmem [thread:$0]  %s1, 128, %s27, [#allocation6]
    $region9: #{tpu_custom_call.1} parent=1 // pred_fallthru
      _
    // Predicated region
    $region10: #{tpu_custom_call.1} parent=1 // pred_check
      _
    $region11: #{tpu_custom_call.1} parent=1 // pred_check_branch
      %31 = sbr.rel (0) target = $region13
    $region12: #{tpu_custom_call.1} parent=1 // pred_region
      %32 = dma.done [#allocation3], 256
    $region13: #{tpu_custom_call.1} parent=1 // pred_fallthru
      _
    // Predicated region
    $region14: #{tpu_custom_call.1} parent=1 // pred_check
      _
    $region15: #{tpu_custom_call.1} parent=1 // pred_check_branch
      %34 = sbr.rel (0) target = $region17
    $region16: #{tpu_custom_call.1} parent=1 // pred_region
      %35 = dma.done [#allocation6], 128
    $region17: #{tpu_custom_call.1} parent=1 // pred_fallthru
      _
    %v36 = vld [vmem:[#allocation2] sm:$0xff]
    %v37 = vld [vmem:[#allocation2 + $0x8] sm:$0xff]
    %v38 = vld [vmem:[#allocation5] sm:$0xff]
    %v39 = vlaneseq
    %v40 = vand.u32 %v39, 127
    %v41 = vadd.s32 %v40, 128
    %v42 = vadd.s32 %v40, 256
    %v43 = vadd.s32 %v40, 384
    %v44 = vand.u32 %v40, 255
    %v45 = vand.u32 %v41, 255
    %v46 = vand.u32 %v42, 255
    %v47 = vand.u32 %v43, 255
    %v48 = vshra.s32 %v44, 4
    %v49 = vshra.s32 %v45, 4
    %v50 = vshra.s32 %v46, 4
    %v51 = vshra.s32 %v47, 4
    %v52 = vand.u32 %v44, 15
    %v53 = vand.u32 %v45, 15
    %v54 = vand.u32 %v46, 15
    %v55 = vand.u32 %v47, 15
    %vm56 = vcmp.ge.s32.totalorder %v48, 1
    %vm57 = vcmp.ge.s32.totalorder %v49, 1
    %vm58 = vcmp.ge.s32.totalorder %v50, 1
    %vm59 = vcmp.ge.s32.totalorder %v51, 1
    %vm60 = vcmp.lt.s32.totalorder %v48, 15
    %vm61 = vcmp.lt.s32.totalorder %v49, 15
    %vm62 = vcmp.lt.s32.totalorder %v50, 15
    %vm63 = vcmp.lt.s32.totalorder %v51, 15
    %vm64 = vcmp.ge.s32.totalorder %v52, 1
    %vm65 = vcmp.ge.s32.totalorder %v53, 1
    %vm66 = vcmp.ge.s32.totalorder %v54, 1
    %vm67 = vcmp.ge.s32.totalorder %v55, 1
    %vm68 = vcmp.lt.s32.totalorder %v52, 15
    %vm69 = vcmp.lt.s32.totalorder %v53, 15
    %vm70 = vcmp.lt.s32.totalorder %v54, 15
    %vm71 = vcmp.lt.s32.totalorder %v55, 15
    %v74 = vcombine.high %v36, %v36
    %v75 = vcombine.high %v37, %v37
    %78 = vrot.lane.b32.xlu0 %v36, 17
    %v79 = vpop.permute.xlu0 %78
    %80 = vrot.lane.b32.xlu0 %v74, 17
    %v81 = vpop.permute.xlu0 %80
    %82 = vrot.lane.b32.xlu0 %v37, 17
    %v83 = vpop.permute.xlu0 %82
    %84 = vrot.lane.b32.xlu0 %v75, 17
    %v85 = vpop.permute.xlu0 %84
    %vm86 = vcmp.lt.s32.totalorder %v40, 17
    %v87 = vsel %vm86, %v83, %v85
    %v88 = vsel %vm86, %v81, %v83
    %v89 = vsel %vm86, %v79, %v81
    %v90 = vsel %vm86, %v85, %v79
    %vm91 = vmand %vm56, %vm64
    %vm92 = vmand %vm57, %vm65
    %vm93 = vmand %vm58, %vm66
    %vm94 = vmand %vm59, %vm67
    %v95 = vsel %vm91, 1, 0
    %v96 = vsel %vm92, 1, 0
    %v97 = vsel %vm93, 1, 0
    %v98 = vsel %vm94, 1, 0
    %vm99 = vcmp.eq.s32.totalorder %v95, 1
    %vm100 = vcmp.eq.s32.totalorder %v96, 1
    %vm101 = vcmp.eq.s32.totalorder %v97, 1
    %vm102 = vcmp.eq.s32.totalorder %v98, 1
    %v103 = vsel %vm99, %v90, 0.0
    %v104 = vsel %vm100, %v89, 0.0
    %v105 = vsel %vm101, %v88, 0.0
    %v106 = vsel %vm102, %v87, 0.0
    %107 = vrot.lane.b32.xlu0 %v36, 16
    %v108 = vpop.permute.xlu0 %107
    %109 = vrot.lane.b32.xlu0 %v74, 16
    %v110 = vpop.permute.xlu0 %109
    %111 = vrot.lane.b32.xlu0 %v37, 16
    %v112 = vpop.permute.xlu0 %111
    %113 = vrot.lane.b32.xlu0 %v75, 16
    %v114 = vpop.permute.xlu0 %113
    %vm115 = vcmp.lt.s32.totalorder %v40, 16
    %v116 = vsel %vm115, %v112, %v114
    %v117 = vsel %vm115, %v110, %v112
    %v118 = vsel %vm115, %v108, %v110
    %v119 = vsel %vm115, %v114, %v108
    %v120 = vsel %vm56, 1, 0
    %v121 = vsel %vm57, 1, 0
    %v122 = vsel %vm58, 1, 0
    %v123 = vsel %vm59, 1, 0
    %vm124 = vcmp.eq.s32.totalorder %v120, 1
    %vm125 = vcmp.eq.s32.totalorder %v121, 1
    %vm126 = vcmp.eq.s32.totalorder %v122, 1
    %vm127 = vcmp.eq.s32.totalorder %v123, 1
    %v128 = vsel %vm124, %v119, 0.0
    %v129 = vsel %vm125, %v118, 0.0
    %v130 = vsel %vm126, %v117, 0.0
    %v131 = vsel %vm127, %v116, 0.0
    %132 = vrot.lane.b32.xlu0 %v36, 15
    %v133 = vpop.permute.xlu0 %132
    %134 = vrot.lane.b32.xlu0 %v74, 15
    %v135 = vpop.permute.xlu0 %134
    %136 = vrot.lane.b32.xlu0 %v37, 15
    %v137 = vpop.permute.xlu0 %136
    %138 = vrot.lane.b32.xlu0 %v75, 15
    %v139 = vpop.permute.xlu0 %138
    %vm140 = vcmp.lt.s32.totalorder %v40, 15
    %v141 = vsel %vm140, %v137, %v139
    %v142 = vsel %vm140, %v135, %v137
    %v143 = vsel %vm140, %v133, %v135
    %v144 = vsel %vm140, %v139, %v133
    %vm145 = vmand %vm56, %vm68
    %vm146 = vmand %vm57, %vm69
    %vm147 = vmand %vm58, %vm70
    %vm148 = vmand %vm59, %vm71
    %v149 = vsel %vm145, 1, 0
    %v150 = vsel %vm146, 1, 0
    %v151 = vsel %vm147, 1, 0
    %v152 = vsel %vm148, 1, 0
    %vm153 = vcmp.eq.s32.totalorder %v149, 1
    %vm154 = vcmp.eq.s32.totalorder %v150, 1
    %vm155 = vcmp.eq.s32.totalorder %v151, 1
    %vm156 = vcmp.eq.s32.totalorder %v152, 1
    %v157 = vsel %vm153, %v144, 0.0
    %v158 = vsel %vm154, %v143, 0.0
    %v159 = vsel %vm155, %v142, 0.0
    %v160 = vsel %vm156, %v141, 0.0
    %161 = vrot.lane.b32.xlu0 %v36, 1
    %v162 = vpop.permute.xlu0 %161
    %163 = vrot.lane.b32.xlu0 %v74, 1
    %v164 = vpop.permute.xlu0 %163
    %165 = vrot.lane.b32.xlu0 %v37, 1
    %v166 = vpop.permute.xlu0 %165
    %167 = vrot.lane.b32.xlu0 %v75, 1
    %v168 = vpop.permute.xlu0 %167
    %vm169 = vcmp.lt.s32.totalorder %v40, 1
    %v170 = vsel %vm169, %v166, %v168
    %v171 = vsel %vm169, %v164, %v166
    %v172 = vsel %vm169, %v162, %v164
    %v173 = vsel %vm169, %v168, %v162
    %v174 = vsel %vm64, 1, 0
    %v175 = vsel %vm65, 1, 0
    %v176 = vsel %vm66, 1, 0
    %v177 = vsel %vm67, 1, 0
    %vm178 = vcmp.eq.s32.totalorder %v174, 1
    %vm179 = vcmp.eq.s32.totalorder %v175, 1
    %vm180 = vcmp.eq.s32.totalorder %v176, 1
    %vm181 = vcmp.eq.s32.totalorder %v177, 1
    %v182 = vsel %vm178, %v173, 0.0
    %v183 = vsel %vm179, %v172, 0.0
    %v184 = vsel %vm180, %v171, 0.0
    %v185 = vsel %vm181, %v170, 0.0
    %186 = vrot.lane.b32.xlu0 %v36, 127
    %v187 = vpop.permute.xlu0 %186
    %188 = vrot.lane.b32.xlu0 %v74, 127
    %v189 = vpop.permute.xlu0 %188
    %190 = vrot.lane.b32.xlu0 %v37, 127
    %v191 = vpop.permute.xlu0 %190
    %192 = vrot.lane.b32.xlu0 %v75, 127
    %v193 = vpop.permute.xlu0 %192
    %vm194 = vcmp.lt.s32.totalorder %v40, 127
    %v195 = vsel %vm194, %v191, %v193
    %v196 = vsel %vm194, %v189, %v191
    %v197 = vsel %vm194, %v187, %v189
    %v198 = vsel %vm194, %v193, %v187
    %v199 = vsel %vm68, 1, 0
    %v200 = vsel %vm69, 1, 0
    %v201 = vsel %vm70, 1, 0
    %v202 = vsel %vm71, 1, 0
    %vm203 = vcmp.eq.s32.totalorder %v199, 1
    %vm204 = vcmp.eq.s32.totalorder %v200, 1
    %vm205 = vcmp.eq.s32.totalorder %v201, 1
    %vm206 = vcmp.eq.s32.totalorder %v202, 1
    %v207 = vsel %vm203, %v197, 0.0
    %v208 = vsel %vm204, %v196, 0.0
    %v209 = vsel %vm205, %v195, 0.0
    %v210 = vsel %vm206, %v198, 0.0
    %211 = vrot.lane.b32.xlu0 %v36, 113
    %v212 = vpop.permute.xlu0 %211
    %213 = vrot.lane.b32.xlu0 %v74, 113
    %v214 = vpop.permute.xlu0 %213
    %215 = vrot.lane.b32.xlu0 %v37, 113
    %v216 = vpop.permute.xlu0 %215
    %217 = vrot.lane.b32.xlu0 %v75, 113
    %v218 = vpop.permute.xlu0 %217
    %vm219 = vcmp.lt.s32.totalorder %v40, 113
    %v220 = vsel %vm219, %v216, %v218
    %v221 = vsel %vm219, %v214, %v216
    %v222 = vsel %vm219, %v212, %v214
    %v223 = vsel %vm219, %v218, %v212
    %vm224 = vmand %vm60, %vm64
    %vm225 = vmand %vm61, %vm65
    %vm226 = vmand %vm62, %vm66
    %vm227 = vmand %vm63, %vm67
    %v228 = vsel %vm224, 1, 0
    %v229 = vsel %vm225, 1, 0
    %v230 = vsel %vm226, 1, 0
    %v231 = vsel %vm227, 1, 0
    %vm232 = vcmp.eq.s32.totalorder %v228, 1
    %vm233 = vcmp.eq.s32.totalorder %v229, 1
    %vm234 = vcmp.eq.s32.totalorder %v230, 1
    %vm235 = vcmp.eq.s32.totalorder %v231, 1
    %v236 = vsel %vm232, %v222, 0.0
    %v237 = vsel %vm233, %v221, 0.0
    %v238 = vsel %vm234, %v220, 0.0
    %v239 = vsel %vm235, %v223, 0.0
    %240 = vrot.lane.b32.xlu0 %v36, 112
    %v241 = vpop.permute.xlu0 %240
    %242 = vrot.lane.b32.xlu0 %v74, 112
    %v243 = vpop.permute.xlu0 %242
    %244 = vrot.lane.b32.xlu0 %v37, 112
    %v245 = vpop.permute.xlu0 %244
    %246 = vrot.lane.b32.xlu0 %v75, 112
    %v247 = vpop.permute.xlu0 %246
    %vm248 = vcmp.lt.s32.totalorder %v40, 112
    %v249 = vsel %vm248, %v245, %v247
    %v250 = vsel %vm248, %v243, %v245
    %v251 = vsel %vm248, %v241, %v243
    %v252 = vsel %vm248, %v247, %v241
    %v253 = vsel %vm60, 1, 0
    %v254 = vsel %vm61, 1, 0
    %v255 = vsel %vm62, 1, 0
    %v256 = vsel %vm63, 1, 0
    %vm257 = vcmp.eq.s32.totalorder %v253, 1
    %vm258 = vcmp.eq.s32.totalorder %v254, 1
    %vm259 = vcmp.eq.s32.totalorder %v255, 1
    %vm260 = vcmp.eq.s32.totalorder %v256, 1
    %v261 = vsel %vm257, %v251, 0.0
    %v262 = vsel %vm258, %v250, 0.0
    %v263 = vsel %vm259, %v249, 0.0
    %v264 = vsel %vm260, %v252, 0.0
    %265 = vrot.lane.b32.xlu0 %v36, 111
    %v266 = vpop.permute.xlu0 %265
    %267 = vrot.lane.b32.xlu0 %v74, 111
    %v268 = vpop.permute.xlu0 %267
    %269 = vrot.lane.b32.xlu0 %v37, 111
    %v270 = vpop.permute.xlu0 %269
    %271 = vrot.lane.b32.xlu0 %v75, 111
    %v272 = vpop.permute.xlu0 %271
    %vm273 = vcmp.lt.s32.totalorder %v40, 111
    %v274 = vsel %vm273, %v270, %v272
    %v275 = vsel %vm273, %v268, %v270
    %v276 = vsel %vm273, %v266, %v268
    %v277 = vsel %vm273, %v272, %v266
    %vm278 = vmand %vm60, %vm68
    %vm279 = vmand %vm61, %vm69
    %vm280 = vmand %vm62, %vm70
    %vm281 = vmand %vm63, %vm71
    %v282 = vsel %vm278, 1, 0
    %v283 = vsel %vm279, 1, 0
    %v284 = vsel %vm280, 1, 0
    %v285 = vsel %vm281, 1, 0
    %vm286 = vcmp.eq.s32.totalorder %v282, 1
    %vm287 = vcmp.eq.s32.totalorder %v283, 1
    %vm288 = vcmp.eq.s32.totalorder %v284, 1
    %vm289 = vcmp.eq.s32.totalorder %v285, 1
    %v290 = vsel %vm286, %v276, 0.0
    %v291 = vsel %vm287, %v275, 0.0
    %v292 = vsel %vm288, %v274, 0.0
    %v293 = vsel %vm289, %v277, 0.0
    %v298 = vrot.slane %v128, 4
    %v299 = vrot.slane %v129, 4
    %v300 = vrot.slane %v130, 4
    %v301 = vrot.slane %v131, 4
    %v310 = vrot.slane %v182, 4
    %v311 = vrot.slane %v183, 4
    %v312 = vrot.slane %v184, 4
    %v313 = vrot.slane %v185, 4
    %v322 = vrot.slane %v207, 4
    %v323 = vrot.slane %v208, 4
    %v324 = vrot.slane %v209, 4
    %v325 = vrot.slane %v210, 4
    %v334 = vrot.slane %v261, 4
    %v335 = vrot.slane %v262, 4
    %v336 = vrot.slane %v263, 4
    %v337 = vrot.slane %v264, 4
    %vm342 = vcmask 1043456
    %v343 = vsel %vm342, %v103, %v298
    %v344 = vsel %vm342, %v104, %v299
    %v345 = vsel %vm342, %v105, %v300
    %v346 = vsel %vm342, %v106, %v301
    %v347 = vsel %vm342, %v157, %v310
    %v348 = vsel %vm342, %v158, %v311
    %v349 = vsel %vm342, %v159, %v312
    %v350 = vsel %vm342, %v160, %v313
    %v351 = vsel %vm342, %v36, %v322
    %v352 = vsel %vm342, %v74, %v323
    %v353 = vsel %vm342, %v37, %v324
    %v354 = vsel %vm342, %v75, %v325
    %v355 = vsel %vm342, %v236, %v334
    %v356 = vsel %vm342, %v237, %v335
    %v357 = vsel %vm342, %v238, %v336
    %v358 = vsel %vm342, %v239, %v337
    %vm359 = vcmask 293888
    %v361 = vsel %vm359, %v38, 0
    %v364 = vsel %vm342, %v290, 0
    %v367 = vsel %vm342, %v291, 0
    %v370 = vsel %vm342, %v292, 0
    %v373 = vsel %vm342, %v293, 0
    %375 = vmatprep.subr.mxu0 0.0
    %376 = vmatpush1.msra.mxu0 0.0
    %377 = vmatprep.subr.mxu0 0.0
    %378 = vmatpush1.msra.mxu0 0.0
    %379 = vmatprep.subr.mxu0 0.0
    %380 = vmatpush1.msra.mxu0 0.0
    %381 = vmatprep.subr.mxu0 0.0
    %382 = vmatpush1.msra.mxu0 0.0
    %383 = vmatprep.subr.mxu0 0.0
    %384 = vmatpush1.msra.mxu0 0.0
    %385 = vmatprep.subr.mxu0 0.0
    %386 = vmatpush1.msra.mxu0 0.0
    %387 = vmatprep.subr.mxu0 0.0
    %388 = vmatpush1.msra.mxu0 0.0
    %389 = vmatprep.subr.mxu0 0.0
    %390 = vmatpush1.msra.mxu0 0.0
    %391 = vmatprep.subr.mxu0 0.0
    %392 = vmatpush1.msra.mxu0 0.0
    %393 = vmatprep.subr.mxu0 0.0
    %394 = vmatpush1.msra.mxu0 0.0
    %395 = vmatprep.subr.mxu0 0.0
    %396 = vmatpush1.msra.mxu0 0.0
    %397 = vmatprep.subr.mxu0 %v367
    %398 = vmatpush1.msra.mxu0 %v364
    %399 = vmatprep.subr.mxu0 %v356
    %400 = vmatpush1.msra.mxu0 %v355
    %401 = vmatprep.subr.mxu0 %v352
    %402 = vmatpush1.msra.mxu0 %v351
    %403 = vmatprep.subr.mxu0 %v348
    %404 = vmatpush1.msra.mxu0 %v347
    %405 = vmatprep.subr.mxu0 %v344
    %406 = vmatpush1.msra.mxu0 %v343
    %407 = vmatprep.subr.mxu0 0.0
    %408 = vmatpush2.msra.mxu0 0.0
    %409 = vmatprep.subr.mxu0 0.0
    %410 = vmatpush2.msra.mxu0 0.0
    %411 = vmatprep.subr.mxu0 0.0
    %412 = vmatpush2.msra.mxu0 0.0
    %413 = vmatprep.subr.mxu0 0.0
    %414 = vmatpush2.msra.mxu0 0.0
    %415 = vmatprep.subr.mxu0 0.0
    %416 = vmatpush2.msra.mxu0 0.0
    %417 = vmatprep.subr.mxu0 0.0
    %418 = vmatpush2.msra.mxu0 0.0
    %419 = vmatprep.subr.mxu0 0.0
    %420 = vmatpush2.msra.mxu0 0.0
    %421 = vmatprep.subr.mxu0 0.0
    %422 = vmatpush2.msra.mxu0 0.0
    %423 = vmatprep.subr.mxu0 0.0
    %424 = vmatpush2.msra.mxu0 0.0
    %425 = vmatprep.subr.mxu0 0.0
    %426 = vmatpush2.msra.mxu0 0.0
    %427 = vmatprep.subr.mxu0 0.0
    %428 = vmatpush2.msra.mxu0 0.0
    %429 = vmatprep.subr.mxu0 0.0
    %430 = vmatpush2.msra.mxu0 0.0
    %431 = vmatprep.subr.mxu0 0.0
    %432 = vmatpush2.msra.mxu0 0.0
    %433 = vmatprep.subr.mxu0 0.0
    %434 = vmatpush2.msra.mxu0 0.0
    %435 = vmatprep.subr.mxu0 0.0
    %436 = vmatpush2.msra.mxu0 0.0
    %437 = vmatprep.subr.mxu0 0.0
    %438 = vmatpush2.msra.mxu0 0.0
    %439 = vmatprep.mubr.f32.mxu0 0.0
    %440 = vmatmul.mubr.f32.gmra.mxu0 %v361
    %v441 = vpop.f32.mrf.mxu0
    %v442 = vadd.f32 0.0, %v441
    %v443 = vpop.f32.mrf.mxu0
    %v444 = vadd.f32 0.0, %v443
    %445 = vdwg.mxu0
    %446 = vmatprep.subr.mxu0 0.0
    %447 = vmatpush1.msra.mxu0 0.0
    %448 = vmatprep.subr.mxu0 0.0
    %449 = vmatpush1.msra.mxu0 0.0
    %450 = vmatprep.subr.mxu0 0.0
    %451 = vmatpush1.msra.mxu0 0.0
    %452 = vmatprep.subr.mxu0 0.0
    %453 = vmatpush1.msra.mxu0 0.0
    %454 = vmatprep.subr.mxu0 0.0
    %455 = vmatpush1.msra.mxu0 0.0
    %456 = vmatprep.subr.mxu0 0.0
    %457 = vmatpush1.msra.mxu0 0.0
    %458 = vmatprep.subr.mxu0 0.0
    %459 = vmatpush1.msra.mxu0 0.0
    %460 = vmatprep.subr.mxu0 0.0
    %461 = vmatpush1.msra.mxu0 0.0
    %462 = vmatprep.subr.mxu0 0.0
    %463 = vmatpush1.msra.mxu0 0.0
    %464 = vmatprep.subr.mxu0 0.0
    %465 = vmatpush1.msra.mxu0 0.0
    %466 = vmatprep.subr.mxu0 0.0
    %467 = vmatpush1.msra.mxu0 0.0
    %468 = vmatprep.subr.mxu0 %v373
    %469 = vmatpush1.msra.mxu0 %v370
    %470 = vmatprep.subr.mxu0 %v358
    %471 = vmatpush1.msra.mxu0 %v357
    %472 = vmatprep.subr.mxu0 %v354
    %473 = vmatpush1.msra.mxu0 %v353
    %474 = vmatprep.subr.mxu0 %v350
    %475 = vmatpush1.msra.mxu0 %v349
    %476 = vmatprep.subr.mxu0 %v346
    %477 = vmatpush1.msra.mxu0 %v345
    %478 = vmatprep.subr.mxu0 0.0
    %479 = vmatpush2.msra.mxu0 0.0
    %480 = vmatprep.subr.mxu0 0.0
    %481 = vmatpush2.msra.mxu0 0.0
    %482 = vmatprep.subr.mxu0 0.0
    %483 = vmatpush2.msra.mxu0 0.0
    %484 = vmatprep.subr.mxu0 0.0
    %485 = vmatpush2.msra.mxu0 0.0
    %486 = vmatprep.subr.mxu0 0.0
    %487 = vmatpush2.msra.mxu0 0.0
    %488 = vmatprep.subr.mxu0 0.0
    %489 = vmatpush2.msra.mxu0 0.0
    %490 = vmatprep.subr.mxu0 0.0
    %491 = vmatpush2.msra.mxu0 0.0
    %492 = vmatprep.subr.mxu0 0.0
    %493 = vmatpush2.msra.mxu0 0.0
    %494 = vmatprep.subr.mxu0 0.0
    %495 = vmatpush2.msra.mxu0 0.0
    %496 = vmatprep.subr.mxu0 0.0
    %497 = vmatpush2.msra.mxu0 0.0
    %498 = vmatprep.subr.mxu0 0.0
    %499 = vmatpush2.msra.mxu0 0.0
    %500 = vmatprep.subr.mxu0 0.0
    %501 = vmatpush2.msra.mxu0 0.0
    %502 = vmatprep.subr.mxu0 0.0
    %503 = vmatpush2.msra.mxu0 0.0
    %504 = vmatprep.subr.mxu0 0.0
    %505 = vmatpush2.msra.mxu0 0.0
    %506 = vmatprep.subr.mxu0 0.0
    %507 = vmatpush2.msra.mxu0 0.0
    %508 = vmatprep.subr.mxu0 0.0
    %509 = vmatpush2.msra.mxu0 0.0
    %510 = vmatprep.mubr.f32.mxu0 0.0
    %511 = vmatmul.mubr.f32.gmra.mxu0 %v361
    %v512 = vpop.f32.mrf.mxu0
    %v513 = vadd.f32 0.0, %v512
    %v514 = vpop.f32.mrf.mxu0
    %v515 = vadd.f32 0.0, %v514
    %516 = vdwg.mxu0
    %v517 = vmax.f32 %v442, 0.0
    %v518 = vmax.f32 %v444, 0.0
    %v519 = vmax.f32 %v513, 0.0
    %v520 = vmax.f32 %v515, 0.0
    %v525 = vrot.slane %v517, 4
    %v526 = vrot.slane %v518, 4
    %v527 = vrot.slane %v519, 4
    %v528 = vrot.slane %v520, 4
    %v533 = vsel %vm342, %v36, %v525
    %v534 = vsel %vm342, %v74, %v526
    %v535 = vsel %vm342, %v37, %v527
    %v536 = vsel %vm342, %v75, %v528
    %537 = vst [vmem:[#allocation7] sm:$0xff] %v533
    %538 = vst [vmem:[#allocation7 + $0x8] sm:$0xff] %v534
    %539 = vst [vmem:[#allocation7 + $0x10] sm:$0xff] %v535
    %540 = vst [vmem:[#allocation7 + $0x18] sm:$0xff] %v536
    %541 = vst [vmem:[#allocation7 + $0x20] sm:$0xf] %v525
    %542 = vst [vmem:[#allocation7 + $0x28] sm:$0xf] %v526
    %543 = vst [vmem:[#allocation7 + $0x30] sm:$0xf] %v527
    %544 = vst [vmem:[#allocation7 + $0x38] sm:$0xf] %v528
    // Predicated region
    $region18: #{tpu_custom_call.1} parent=1 // pred_check
      _
    $region19: #{tpu_custom_call.1} parent=1 // pred_check_branch
      %546 = sbr.rel (0) target = $region21
    $region20: #{tpu_custom_call.1} parent=1 // pred_region
      %s548 = ssub.s32 1024, 1024
      %549 = vsyncadd [#allocation4], %s548
      %s550 = sshll.u32 [#allocation7], 4
      %s551 = int_to_ptr.vmem [resolvable:$true] %s550
      %556 = dma.vmem_to_hbm [thread:$0]  %s551, 1024, %s2, [#allocation4], 512, 512, 32
    $region21: #{tpu_custom_call.1} parent=1 // pred_fallthru
      _
    // Predicated region
    $region22: #{tpu_custom_call.1} parent=1 // pred_check
      _
    $region23: #{tpu_custom_call.1} parent=1 // pred_check_branch
      %558 = sbr.rel (0) target = $region25
    $region24: #{tpu_custom_call.1} parent=1 // pred_region
      %559 = dma.done [#allocation4], 1024
    $region25: #{tpu_custom_call.1} parent=1 // pred_fallthru
      _
    %560 = vsyncpa [#allocation3], 1
    %561 = vsyncpa [#allocation6], 1
    %562 = vsyncpa [#allocation4], 1

</llo_original>
